<compile_context>
chip_gen: v7x
topology: tpu7x:2x2x1
jax: 0.10.0
libtpu: 0.0.40
codegen_flags: <defaults>
</compile_context>

<pallas_src>
import math

import numpy as np

import jax
import jax.numpy as jnp
from jax.experimental import pallas as pl
from jax.experimental.pallas import tpu as pltpu


# ------------------------------ Pallas kernel --------------------------------

def _sam_kernel(x_ref, mi_ref, wmat_ref, o_ref):
    """One grid step: `nb` batch elements in lane-dense (C, H*W) layout.

    x_ref:    (nb, C, HW)   VMEM  input block
    mi_ref:   (C, 1)        VMEM  important-channel mask (0/1)
    wmat_ref: (2, HW, HW)   VMEM  shared 7x7 conv as dense matmul operators
                                  [0] acts on the channel-max plane,
                                  [1] acts on the channel-mean plane
    o_ref:    (nb, C, HW)   VMEM  output block
    """
    nb, c, hw = x_ref.shape
    inv_c = 1.0 / c
    mi = mi_ref[...]                                     # (C, 1), 0/1
    one_minus_mi = 1.0 - mi                              # hoisted (no CSE in loop)

    # ---- per batch element: masked split + channel max / mean descriptors ---
    # Rows are kept in vregs and packed along M:
    #   rows [0, nb)     -> important split          rows [nb, 2*nb) -> sub split
    max_rows = []
    avg_rows = []
    for b in range(nb):
        xb = x_ref[b].astype(jnp.float32)                # (C, HW)
        f1 = xb * mi                                     # important features
        f2 = xb - f1                                     # complementary 0/1 mask
        max_rows.append(jnp.max(f1, axis=0, keepdims=True))
        s1 = jnp.sum(f1, axis=0, keepdims=True) * inv_c  # mean over ALL C
        sx = jnp.sum(xb, axis=0, keepdims=True) * inv_c
        avg_rows.append((s1, sx - s1, jnp.max(f2, axis=0, keepdims=True)))

    max_desc = jnp.concatenate(
        max_rows + [r[2] for r in avg_rows], axis=0)     # (2*nb, HW)
    avg_desc = jnp.concatenate(
        [r[0] for r in avg_rows] + [r[1] for r in avg_rows], axis=0)

    # ---- shared 7x7 conv for both splits as M-packed MXU matmuls ------------
    logits = (
        jnp.dot(max_desc, wmat_ref[0], preferred_element_type=jnp.float32)
        + jnp.dot(avg_desc, wmat_ref[1], preferred_element_type=jnp.float32)
    )                                                    # (2*nb, HW)
    att = jax.nn.sigmoid(logits)                         # rows: [A_s1 | A_s2]

    # ---- recombination: out = x * (mi*A_s1 + (1-mi)*A_s2)  (masks are 0/1) --
    for b in range(nb):
        xb = x_ref[b].astype(jnp.float32)
        attb = (mi * att[b:b + 1, :]
                + one_minus_mi * att[nb + b:nb + b + 1, :])   # (C, HW)
        o_ref[b] = (xb * attb).astype(o_ref.dtype)


# ------------------------------ host-side helpers ----------------------------

def _conv_as_dense_matmul(conv_w, H, W):
    """Rewrite the 2->1 channel 7x7 'same' conv (cross-correlation, no bias)
    as two dense (HW, HW) operators: logits_flat = max_flat @ M0 + avg_flat @ M1.
    Zero padding is baked into the operators, so no in-kernel masking/padding."""
    wt = np.asarray(conv_w, dtype=np.float32).reshape(2, 7, 7)
    HW = H * W
    hh, ww = np.meshgrid(np.arange(H), np.arange(W), indexing="ij")
    q = (hh * W + ww).reshape(-1)
    mats = np.zeros((2, HW, HW), np.float32)
    for dh in range(7):
        for dw in range(7):
            sh = hh + dh - 3
            sw = ww + dw - 3
            valid = ((sh >= 0) & (sh < H) & (sw >= 0) & (sw < W)).reshape(-1)
            p = (sh * W + sw).reshape(-1)
            mats[0, p[valid], q[valid]] += wt[0, dh, dw]
            mats[1, p[valid], q[valid]] += wt[1, dh, dw]
    return jnp.asarray(mats)


def _pick_block_batch(n, c, hw, itemsize,
                      vmem_budget_bytes=32 * 1024 * 1024, max_unroll=8):
    """Largest nb that divides n, fits a conservative VMEM budget
    (in + out, double-buffered), keeps the per-step unroll small, and keeps
    the grid length >= 2 so v7x's two TensorCores both get work."""
    per_n = c * hw * itemsize * 2 * 2
    best = 1
    for nb in range(1, min(n, max_unroll) + 1):
        if n % nb:
            continue
        if nb * per_n > vmem_budget_bytes:
            continue
        if n >= 2 and n // nb < 2:
            continue
        best = nb
    return best


def spatial_attention_module(x, imp_mask, conv_w, *, block_batch=None):
    """x: (N, C, H, W); imp_mask: (1, C, 1, 1) 0/1 (sub mask is its complement);
    conv_w: (1, 2, 7, 7) shared conv weight (cross-correlation, no bias)."""
    N, C, H, W = x.shape
    HW = H * W

    # Lane-dense layouts; these reshapes are free XLA bitcasts outside the kernel.
    x2 = x.reshape(N, C, HW)
    mi = imp_mask.reshape(C, 1).astype(jnp.float32)
    wmat = _conv_as_dense_matmul(conv_w, H, W)           # (2, HW, HW)

    nb = _pick_block_batch(N, C, HW, x.dtype.itemsize) \
        if block_batch is None else block_batch

    out2 = pl.pallas_call(
        _sam_kernel,
        out_shape=jax.ShapeDtypeStruct((N, C, HW), x.dtype),
        grid_spec=pltpu.PrefetchScalarGridSpec(
            num_scalar_prefetch=0,
            grid=(N // nb,),
            in_specs=[
                pl.BlockSpec((nb, C, HW), lambda n: (n, 0, 0)),
                pl.BlockSpec((C, 1), lambda n: (0, 0)),
                pl.BlockSpec((2, HW, HW), lambda n: (0, 0, 0)),
            ],
            out_specs=pl.BlockSpec((nb, C, HW), lambda n: (n, 0, 0)),
        ),
        compiler_params=pltpu.CompilerParams(
            dimension_semantics=("parallel",),
            vmem_limit_bytes=48 * 1024 * 1024,
        ),
    )(x2, mi, wmat)
    return out2.reshape(N, C, H, W)


# --------------------------- parameter / mask glue ----------------------------

def make_params(key, in_channels):
    """Deterministic stand-ins for torch.randn attention_map & conv weight."""
    k1, k2 = jax.random.split(key)
    attention_map = jax.random.normal(k1, (1, in_channels, 1, 1), jnp.float32)
    fan_in = 2 * 7 * 7
    bound = 1.0 / math.sqrt(fan_in)
    conv_w = jax.random.uniform(k2, (1, 2, 7, 7), jnp.float32, -bound, bound)
    return attention_map, conv_w


def channel_separation_masks(attention_map, separation_rate=0.5):
    """One-time parameter setup (argsort on a tiny per-channel vector)."""
    C = attention_map.shape[1]
    C_im = int(C * separation_rate)
    C_im = C_im if C_im % 2 == 0 else C_im + 1
    flat = attention_map.reshape(-1)
    order = jnp.argsort(-flat)
    important_idx = order[:C_im]
    imp = jnp.zeros((C,), jnp.float32).at[important_idx].set(1.0)
    sub = 1.0 - imp
    return imp.reshape(1, C, 1, 1), sub.reshape(1, C, 1, 1)


# ------------------------------ plain-JAX reference ---------------------------

def reference(x, imp_mask, sub_mask, conv_w):
    f1 = x * imp_mask
    f2 = x * sub_mask

    def att(f):
        fmax = jnp.max(f, axis=1, keepdims=True)
        favg = jnp.mean(f, axis=1, keepdims=True)
        comb = jnp.concatenate([fmax, favg], axis=1)
        out = jax.lax.conv_general_dilated(
            comb, conv_w, window_strides=(1, 1), padding=[(3, 3), (3, 3)],
            dimension_numbers=("NCHW", "OIHW", "NCHW"))
        return jax.nn.sigmoid(out)

    a1 = att(f1)
    a2 = att(f2)
    return f1 * a1 + f2 * a2


if __name__ == "__main__":
    key = jax.random.PRNGKey(0)
    kx, kp = jax.random.split(key)

    N, C, H, W = 2, 4, 16, 16
    x = jax.random.normal(kx, (N, C, H, W), jnp.float32)

    attention_map, conv_w = make_params(kp, C)
    imp_mask, sub_mask = channel_separation_masks(attention_map, 0.5)

    # Invariant required by the in-kernel simplifications
    # (f2 = x - f1 and out = x * (mi*A_s1 + (1-mi)*A_s2)).
    np.testing.assert_array_equal(
        np.asarray(imp_mask) + np.asarray(sub_mask),
        np.ones_like(np.asarray(imp_mask)))

    out = spatial_attention_module(x, imp_mask, conv_w)
    out = jax.block_until_ready(out)

    ref = reference(x, imp_mask, sub_mask, conv_w)
    # Tolerance covers possible multi-pass decomposition of f32 MXU matmuls
    # while still catching any structural/indexing error.
    np.testing.assert_allclose(np.asarray(out), np.asarray(ref),
                               rtol=5e-3, atol=5e-3)
    print("KERNEL_OK")
</pallas_src>

<mosaic_0001>
module attributes {stable_mosaic.version = 11 : i64} {
  func.func @_sam_kernel(%arg0: i32, %arg1: memref<1x4x256xf32, #tpu.memory_space<vmem>>, %arg2: memref<4x1xf32, #tpu.memory_space<vmem>>, %arg3: memref<2x256x256xf32, #tpu.memory_space<vmem>>, %arg4: memref<1x4x256xf32, #tpu.memory_space<vmem>>) attributes {dimension_semantics = [#tpu.dimension_semantics<parallel>], iteration_bounds = array<i64: 2>, scalar_prefetch = 0 : i64, scratch_operands = 0 : i64, tpu.core_type = #tpu.core_type<tc>, window_params = [{transform_indices = @transform_0, window_bounds = array<i64: 1, 4, 256>}, {pipeline_mode = #tpu.pipeline_mode<synchronous>, transform_indices = @transform_1, window_bounds = array<i64: 4, 1>}, {pipeline_mode = #tpu.pipeline_mode<synchronous>, transform_indices = @transform_2, window_bounds = array<i64: 2, 256, 256>}, {transform_indices = @transform_3, window_bounds = array<i64: 1, 4, 256>}]} {
    %c0 = arith.constant 0 : index
    %c0_0 = arith.constant 0 : index
    %0 = vector.load %arg2[%c0, %c0_0] : memref<4x1xf32, #tpu.memory_space<vmem>>, vector<4x1xf32>
    %cst = arith.constant 1.000000e+00 : f32
    %1 = vector.broadcast %cst : f32 to vector<4x1xf32>
    %2 = arith.subf %1, %0 : vector<4x1xf32>
    %c0_1 = arith.constant 0 : index
    %c0_2 = arith.constant 0 : index
    %c0_3 = arith.constant 0 : index
    %3 = vector.load %arg1[%c0_1, %c0_2, %c0_3] : memref<1x4x256xf32, #tpu.memory_space<vmem>>, vector<1x4x256xf32>
    %4 = vector.shape_cast %3 : vector<1x4x256xf32> to vector<4x256xf32>
    %5 = vector.broadcast %0 : vector<4x1xf32> to vector<4x256xf32>
    %6 = arith.mulf %4, %5 : vector<4x256xf32>
    %7 = arith.subf %4, %6 : vector<4x256xf32>
    %cst_4 = arith.constant dense<0xFF800000> : vector<256xf32>
    %8 = vector.multi_reduction <maximumf>, %6, %cst_4 [0] : vector<4x256xf32> to vector<256xf32>
    %9 = vector.shape_cast %8 : vector<256xf32> to vector<1x256xf32>
    %cst_5 = arith.constant dense<0.000000e+00> : vector<256xf32>
    %10 = vector.multi_reduction <add>, %6, %cst_5 [0] : vector<4x256xf32> to vector<256xf32>
    %11 = vector.shape_cast %10 : vector<256xf32> to vector<1x256xf32>
    %cst_6 = arith.constant 2.500000e-01 : f32
    %12 = vector.broadcast %cst_6 : f32 to vector<1x256xf32>
    %13 = arith.mulf %11, %12 : vector<1x256xf32>
    %cst_7 = arith.constant dense<0.000000e+00> : vector<256xf32>
    %14 = vector.multi_reduction <add>, %4, %cst_7 [0] : vector<4x256xf32> to vector<256xf32>
    %15 = vector.shape_cast %14 : vector<256xf32> to vector<1x256xf32>
    %cst_8 = arith.constant 2.500000e-01 : f32
    %16 = vector.broadcast %cst_8 : f32 to vector<1x256xf32>
    %17 = arith.mulf %15, %16 : vector<1x256xf32>
    %18 = arith.subf %17, %13 : vector<1x256xf32>
    %cst_9 = arith.constant dense<0xFF800000> : vector<256xf32>
    %19 = vector.multi_reduction <maximumf>, %7, %cst_9 [0] : vector<4x256xf32> to vector<256xf32>
    %20 = vector.shape_cast %19 : vector<256xf32> to vector<1x256xf32>
    %21 = tpu.concatenate %9, %20 in 0 : vector<1x256xf32>, vector<1x256xf32> -> vector<2x256xf32>
    %22 = tpu.concatenate %13, %18 in 0 : vector<1x256xf32>, vector<1x256xf32> -> vector<2x256xf32>
    %c0_10 = arith.constant 0 : index
    %c0_11 = arith.constant 0 : index
    %c0_12 = arith.constant 0 : index
    %23 = vector.load %arg3[%c0_10, %c0_11, %c0_12] : memref<2x256x256xf32, #tpu.memory_space<vmem>>, vector<1x256x256xf32>
    %24 = vector.shape_cast %23 : vector<1x256x256xf32> to vector<256x256xf32>
    %cst_13 = arith.constant dense<0.000000e+00> : vector<2x256xf32>
    %25 = tpu.matmul %21, %24, %cst_13 {dimension_numbers = #tpu.dot_dimension_numbers<[1], [0], [0], [1], [0, 0, 1, 1], [], []>} : vector<2x256xf32>, vector<256x256xf32>, vector<2x256xf32> -> vector<2x256xf32>
    %c1 = arith.constant 1 : index
    %c0_14 = arith.constant 0 : index
    %c0_15 = arith.constant 0 : index
    %26 = vector.load %arg3[%c1, %c0_14, %c0_15] : memref<2x256x256xf32, #tpu.memory_space<vmem>>, vector<1x256x256xf32>
    %27 = vector.shape_cast %26 : vector<1x256x256xf32> to vector<256x256xf32>
    %cst_16 = arith.constant dense<0.000000e+00> : vector<2x256xf32>
    %28 = tpu.matmul %22, %27, %cst_16 {dimension_numbers = #tpu.dot_dimension_numbers<[1], [0], [0], [1], [0, 0, 1, 1], [], []>} : vector<2x256xf32>, vector<256x256xf32>, vector<2x256xf32> -> vector<2x256xf32>
    %29 = arith.addf %25, %28 : vector<2x256xf32>
    %30 = arith.negf %29 : vector<2x256xf32>
    %31 = math.exp %30 : vector<2x256xf32>
    %cst_17 = arith.constant 1.000000e+00 : f32
    %32 = vector.broadcast %cst_17 : f32 to vector<2x256xf32>
    %33 = arith.addf %32, %31 : vector<2x256xf32>
    %34 = arith.divf %32, %33 : vector<2x256xf32>
    %c0_18 = arith.constant 0 : index
    %c0_19 = arith.constant 0 : index
    %c0_20 = arith.constant 0 : index
    %35 = vector.load %arg1[%c0_18, %c0_19, %c0_20] : memref<1x4x256xf32, #tpu.memory_space<vmem>>, vector<1x4x256xf32>
    %36 = vector.shape_cast %35 : vector<1x4x256xf32> to vector<4x256xf32>
    %37 = vector.extract_strided_slice %34 {offsets = [0, 0], sizes = [1, 256], strides = [1, 1]} : vector<2x256xf32> to vector<1x256xf32>
    %38 = vector.broadcast %0 : vector<4x1xf32> to vector<4x256xf32>
    %39 = vector.broadcast %37 : vector<1x256xf32> to vector<4x256xf32>
    %40 = arith.mulf %38, %39 : vector<4x256xf32>
    %41 = vector.extract_strided_slice %34 {offsets = [1, 0], sizes = [1, 256], strides = [1, 1]} : vector<2x256xf32> to vector<1x256xf32>
    %42 = vector.broadcast %2 : vector<4x1xf32> to vector<4x256xf32>
    %43 = vector.broadcast %41 : vector<1x256xf32> to vector<4x256xf32>
    %44 = arith.mulf %42, %43 : vector<4x256xf32>
    %45 = arith.addf %40, %44 : vector<4x256xf32>
    %46 = arith.mulf %36, %45 : vector<4x256xf32>
    %c0_21 = arith.constant 0 : index
    %c0_22 = arith.constant 0 : index
    %c0_23 = arith.constant 0 : index
    %47 = vector.load %arg4[%c0_21, %c0_22, %c0_23] : memref<1x4x256xf32, #tpu.memory_space<vmem>>, vector<1x4x256xf32>
    %48 = vector.shape_cast %47 : vector<1x4x256xf32> to vector<4x256xf32>
    %49 = vector.shape_cast %46 : vector<4x256xf32> to vector<1x4x256xf32>
    tpu.vector_store %arg4[%c0_21, %c0_22, %c0_23], %49 {strides = array<i32>} : memref<1x4x256xf32, #tpu.memory_space<vmem>>, vector<1x4x256xf32>,
    return
  }
  func.func @transform_0(%arg0: i32) -> (i32, i32, i32) {
    %c0_i32 = arith.constant 0 : i32
    %c0_i32_0 = arith.constant 0 : i32
    %c0_i32_1 = arith.constant 0 : i32
    return %arg0, %c0_i32, %c0_i32_0 : i32, i32, i32
  }
  func.func @transform_1(%arg0: i32) -> (i32, i32) {
    %c0_i32 = arith.constant 0 : i32
    %c0_i32_0 = arith.constant 0 : i32
    %c0_i32_1 = arith.constant 0 : i32
    return %c0_i32, %c0_i32_0 : i32, i32
  }
  func.func @transform_2(%arg0: i32) -> (i32, i32, i32) {
    %c0_i32 = arith.constant 0 : i32
    %c0_i32_0 = arith.constant 0 : i32
    %c0_i32_1 = arith.constant 0 : i32
    %c0_i32_2 = arith.constant 0 : i32
    return %c0_i32, %c0_i32_0, %c0_i32_1 : i32, i32, i32
  }
  func.func @transform_3(%arg0: i32) -> (i32, i32, i32) {
    %c0_i32 = arith.constant 0 : i32
    %c0_i32_0 = arith.constant 0 : i32
    %c0_i32_1 = arith.constant 0 : i32
    return %arg0, %c0_i32, %c0_i32_0 : i32, i32, i32
  }
}

</mosaic_0001>

<llo_original>
// kernel: tpu_custom_call.1
$region0: #{tpu_custom_call.1}
  #allocation0 [shape = 'u32[]', space=smem, size = 0x4, offset = 0x4, fixed_abs, tag = 'smem constant byte address 0x4 - core index']
  #allocation1 [shape = 'u32[144,128]{1,0:T(1,128)}', space=vmem, size = 0x12000, scoped, tag = 'internal scratch']
  %s0 = inlined_call_operand.hbm [shape: f32[2,4,256], index: 0, kind: input, shape index: {}]
  %s1 = inlined_call_operand.vmem [shape: f32[4,1], index: 1, kind: input, shape index: {}]
  %s2 = inlined_call_operand.hbm [shape: f32[2,256,256], index: 2, kind: input, shape index: {}]
  %s3 = inlined_call_operand.hbm [shape: f32[2,4,256], index: 3, kind: output, shape index: {}]
  %s4 = sld [smem:[#allocation0]]
  $region53: #{tpu_custom_call.1} parent=0
    _
  %s6 = ssub.s32 1, %s4
  %s7 = scalar_select 0, %s6, %s4
  $region1: #{tpu_custom_call.1} parent=0
    #allocation2 [shape = 'u8[8192]{0}', space=vmem, size = 0x2000, scoped, tag = 'input window, operand 0']
    #allocation3 [shape = 's32[2]{0}', space=sflag, size = 0x8, scoped, tag = 'scoped memory for tpu_custom_call.1']
    #allocation4 [shape = 's32[2]{0}', space=sflag, size = 0x8, scoped, tag = 'scoped memory for tpu_custom_call.1']
    #allocation5 [shape = 'u8[524288]{0}', space=vmem, size = 0x80000, scoped, tag = 'input window, operand 2, single buffered']
    #allocation6 [shape = 's32[1]{0}', space=sflag, size = 0x4, scoped, tag = 'scoped memory for tpu_custom_call.1']
    #allocation7 [shape = 'u8[8192]{0}', space=vmem, size = 0x2000, scoped, tag = 'output window, operand 0']
    %8 = vsyncpa [#allocation3], 0
    %s9 = scalar_lea.sflag [#allocation3], 1
    %10 = vsyncpa %s9, 0
    %11 = vsyncpa [#allocation6], 0
    %12 = vsyncpa [#allocation4], 0
    %s13 = scalar_lea.sflag [#allocation4], 1
    %14 = vsyncpa %s13, 0
    loop: start=0, step=1, limit=4
    $region2: #{tpu_custom_call.1} parent=1 // loop_pre_header
      _
    $region3: #{tpu_custom_call.1} parent=1 // loop_header
      %s16 = sphi 0, %s20
      %p17 = scmp.ge.s32.totalorder %s16, 4
      %s26 = sphi 0, %s28
      %s29 = sphi 0, %s26
      %s30 = sphi 0, %s29
      %s46 = sphi 0, %s30
      %s50 = sphi 0, %s50
      %s52 = sphi 0, %s50
      %s53 = sphi 0, %s52
      %s67 = sphi 0, %s53
      %s71 = sphi 0, %s71
      %s73 = sphi 0, %s71
      %s74 = sphi 0, %s73
      %s88 = sphi 0, %s74
      %s94 = sphi 0, %s96
      %s97 = sphi 0, %s94
      %s98 = sphi 0, %s97
      %s114 = sphi 0, %s98
    $region4: #{tpu_custom_call.1} parent=1 // loop_header_branch
      %19 = sbr.rel (%p17) target = $region8
    $region5: #{tpu_custom_call.1} parent=1 // loop_body
      %s21 = ssub.s32 %s16, 1
      %s22 = ssub.s32 %s16, 2
      %s23 = sadd.s32 %s16, 1
      %s24 = ssub.s32 %s16, %s23
      %p25 = scmp.eq.s32.totalorder %s24, 0
      %s27 = sadd.s32 %s26, 1
      %s28 = scalar_select %p25, %s26, %s27
      %p31 = pneg %p25
      %p32 = scmp.eq.s32.totalorder %s16, 1
      %p33 = por %p31, %p32
      %p34 = scmp.ne.s32.totalorder %s26, %s29
      %p35 = scmp.eq.s32.totalorder %s16, 0
      %p36 = por %p34, %p35
      %p37 = scmp.ne.s32.totalorder %s26, %s29
      %p38 = scmp.eq.s32.totalorder %s21, 1
      %p39 = por %p37, %p38
      %p40 = scmp.ne.s32.totalorder %s29, %s30
      %p41 = scmp.eq.s32.totalorder %s21, 0
      %p42 = por %p40, %p41
      %p43 = scmp.ne.s32.totalorder %s29, %s30
      %p44 = scmp.eq.s32.totalorder %s22, 1
      %p45 = por %p43, %p44
      %p47 = scmp.ne.s32.totalorder %s30, %s46
      %p48 = scmp.eq.s32.totalorder %s22, 0
      %p49 = por %p47, %p48
      %s51 = sadd.s32 %s50, 1
      %p54 = scmp.eq.s32.totalorder %s16, 1
      %p55 = scmp.ne.s32.totalorder %s50, %s52
      %p56 = scmp.eq.s32.totalorder %s16, 0
      %p57 = por %p55, %p56
      %p58 = scmp.ne.s32.totalorder %s50, %s52
      %p59 = scmp.eq.s32.totalorder %s21, 1
      %p60 = por %p58, %p59
      %p61 = scmp.ne.s32.totalorder %s52, %s53
      %p62 = scmp.eq.s32.totalorder %s21, 0
      %p63 = por %p61, %p62
      %p64 = scmp.ne.s32.totalorder %s52, %s53
      %p65 = scmp.eq.s32.totalorder %s22, 1
      %p66 = por %p64, %p65
      %p68 = scmp.ne.s32.totalorder %s53, %s67
      %p69 = scmp.eq.s32.totalorder %s22, 0
      %p70 = por %p68, %p69
      %s72 = sadd.s32 %s71, 1
      %p75 = scmp.eq.s32.totalorder %s16, 1
      %p76 = scmp.ne.s32.totalorder %s71, %s73
      %p77 = scmp.eq.s32.totalorder %s16, 0
      %p78 = por %p76, %p77
      %p79 = scmp.ne.s32.totalorder %s71, %s73
      %p80 = scmp.eq.s32.totalorder %s21, 1
      %p81 = por %p79, %p80
      %p82 = scmp.ne.s32.totalorder %s73, %s74
      %p83 = scmp.eq.s32.totalorder %s21, 0
      %p84 = por %p82, %p83
      %p85 = scmp.ne.s32.totalorder %s73, %s74
      %p86 = scmp.eq.s32.totalorder %s22, 1
      %p87 = por %p85, %p86
      %p89 = scmp.ne.s32.totalorder %s74, %s88
      %p90 = scmp.eq.s32.totalorder %s22, 0
      %p91 = por %p89, %p90
      %s92 = ssub.s32 %s16, %s23
      %p93 = scmp.eq.s32.totalorder %s92, 0
      %s95 = sadd.s32 %s94, 1
      %s96 = scalar_select %p93, %s94, %s95
      %p99 = pneg %p93
      %p100 = scmp.eq.s32.totalorder %s16, 1
      %p101 = por %p99, %p100
      %p102 = scmp.ne.s32.totalorder %s94, %s97
      %p103 = scmp.eq.s32.totalorder %s16, 0
      %p104 = por %p102, %p103
      %p105 = scmp.ne.s32.totalorder %s94, %s97
      %p106 = scmp.eq.s32.totalorder %s21, 1
      %p107 = por %p105, %p106
      %p108 = scmp.ne.s32.totalorder %s97, %s98
      %p109 = scmp.eq.s32.totalorder %s21, 0
      %p110 = por %p108, %p109
      %p111 = scmp.ne.s32.totalorder %s97, %s98
      %p112 = scmp.eq.s32.totalorder %s22, 1
      %p113 = por %p111, %p112
      %p115 = scmp.ne.s32.totalorder %s98, %s114
      %p116 = scmp.eq.s32.totalorder %s22, 0
      %p117 = por %p115, %p116
      %p118 = scmp.le.s32.totalorder 1, %s16
      %p119 = scmp.lt.s32.totalorder %s16, 3
      %p120 = pnand %p118, %p119
      %p121 = pneg %p120
      // Predicated region
      $region9: #{tpu_custom_call.1} parent=5 // pred_check
        _
      $region10: #{tpu_custom_call.1} parent=5 // pred_check_branch
        %123 = sbr.rel (%p120) target = $region12
      $region11: #{tpu_custom_call.1} parent=5 // pred_region
        %s124 = ssub.s32 %s16, 1
        // Predicated region
        $region13: #{tpu_custom_call.1} parent=11 // pred_check
          %p125 = pneg %p63
        $region14: #{tpu_custom_call.1} parent=11 // pred_check_branch
          %127 = sbr.rel (%p125) target = $region16
        $region15: #{tpu_custom_call.1} parent=11 // pred_region
          _
        $region16: #{tpu_custom_call.1} parent=11 // pred_fallthru
          _
        // Predicated region
        $region17: #{tpu_custom_call.1} parent=11 // pred_check
          %p128 = pneg %p84
        $region18: #{tpu_custom_call.1} parent=11 // pred_check_branch
          %130 = sbr.rel (%p128) target = $region20
        $region19: #{tpu_custom_call.1} parent=11 // pred_region
          %s132 = ssub.s32 16384, 16384
          %133 = vsyncadd [#allocation6], %s132
          %s134 = sshll.u32 [#allocation5], 4
          %s135 = int_to_ptr.vmem [resolvable:$true] %s134
          %140 = dma.hbm_to_vmem [thread:$0]  %s2, 16384, %s135, [#allocation6], 256, 256, 16
        $region20: #{tpu_custom_call.1} parent=11 // pred_fallthru
          _
      $region12: #{tpu_custom_call.1} parent=5 // pred_fallthru
        _
      %p141 = scmp.lt.s32.totalorder %s16, 2
      // Predicated region
      $region21: #{tpu_custom_call.1} parent=5 // pred_check
        %p142 = pneg %p141
      $region22: #{tpu_custom_call.1} parent=5 // pred_check_branch
        %144 = sbr.rel (%p142) target = $region24
      $region23: #{tpu_custom_call.1} parent=5 // pred_region
        // Predicated region
        $region25: #{tpu_custom_call.1} parent=23 // pred_check
          %p145 = pneg %p36
        $region26: #{tpu_custom_call.1} parent=23 // pred_check_branch
          %147 = sbr.rel (%p145) target = $region28
        $region27: #{tpu_custom_call.1} parent=23 // pred_region
          %s148 = sand.u32 %s26, 1
          %s149 = scalar_lea.sflag [#allocation3], %s148
          %s150 = sand.u32 %s26, 1
          %s151 = smul.addr %s150, 8
          %s152 = scalar_lea.vmem [#allocation2], %s151
          %s154 = ssub.s32 128, 128
          %155 = vsyncadd %s149, %s154
          %s156 = smul.addr %s16, 2
          %s157 = smul.addr %s156, 64
          %s158 = scalar_lea.hbm %s0, %s157
          %s160 = sshll.u32 %s152, 4
          %s161 = int_to_ptr.vmem [resolvable:$true] %s160
          %163 = dma.hbm_to_vmem [thread:$0]  %s158, 128, %s161, %s149
        $region28: #{tpu_custom_call.1} parent=23 // pred_fallthru
          _
      $region24: #{tpu_custom_call.1} parent=5 // pred_fallthru
        _
      %p164 = scmp.le.s32.totalorder 1, %s16
      %p165 = scmp.lt.s32.totalorder %s16, 3
      %p166 = pnand %p164, %p165
      %p167 = pneg %p166
      // Predicated region
      $region29: #{tpu_custom_call.1} parent=5 // pred_check
        _
      $region30: #{tpu_custom_call.1} parent=5 // pred_check_branch
        %169 = sbr.rel (%p166) target = $region32
      $region31: #{tpu_custom_call.1} parent=5 // pred_region
        %s170 = ssub.s32 %s16, 1
        %s171 = sand.u32 %s29, 1
        %s172 = scalar_lea.sflag [#allocation3], %s171
        %s173 = sand.u32 %s29, 1
        %s174 = smul.addr %s173, 8
        %s175 = scalar_lea.vmem [#allocation2], %s174
        // Predicated region
        $region33: #{tpu_custom_call.1} parent=31 // pred_check
          %p176 = pneg %p42
        $region34: #{tpu_custom_call.1} parent=31 // pred_check_branch
          %178 = sbr.rel (%p176) target = $region36
        $region35: #{tpu_custom_call.1} parent=31 // pred_region
          %179 = dma.done %s172, 128
        $region36: #{tpu_custom_call.1} parent=31 // pred_fallthru
          _
        // Predicated region
        $region37: #{tpu_custom_call.1} parent=31 // pred_check
          %p180 = pneg %p84
        $region38: #{tpu_custom_call.1} parent=31 // pred_check_branch
          %182 = sbr.rel (%p180) target = $region40
        $region39: #{tpu_custom_call.1} parent=31 // pred_region
          %183 = dma.done [#allocation6], 16384
        $region40: #{tpu_custom_call.1} parent=31 // pred_fallthru
          _
        %s184 = sand.u32 %s29, 1
        %s185 = scalar_lea.sflag [#allocation3], %s184
        %s186 = sand.u32 %s29, 1
        %s187 = smul.addr %s186, 8
        %s188 = scalar_lea.vmem [#allocation2], %s187
        %p189 = pneg %p42
        %p190 = pneg %p39
        %p191 = pneg %p63
        %p192 = pneg %p60
        %p193 = pneg %p84
        %p194 = pneg %p81
        %p195 = pneg %p110
        %p196 = pneg %p107
        %s197 = sand.u32 %s97, 1
        %s198 = scalar_lea.sflag [#allocation4], %s197
        %s199 = sand.u32 %s97, 1
        %s200 = smul.addr %s199, 8
        %s201 = scalar_lea.vmem [#allocation7], %s200
        %v202 = vld [vmem:[%s1] sm:$0xf]
        %v203 = vsub.f32 1.0, %v202
        %v204 = vld [vmem:[%s175] sm:$0xff]
        %206 = vset.pattern.permute.xlu0 0
        %207 = vperm.xlu0 %206, %v202
        %v208 = vpop.permute.xlu0 %207
        %v211 = vunpack.c.l.s4 839922192
        %v212 = vunpack.c.0.s8 %v211
        %v213 = vlaneseq
        %v214 = vshrl.u32 %v213, 7
        %v215 = vsub.s32 %v212, %v214
        %v216 = vrot.slane %v208, %v215
        %v218 = vmul.f32 %v204, %v216
        %v219 = vsub.f32 %v204, %v218
        %v221 = vcombine.high %v218, %v218
        %vm223 = vcmask 1043456
        %v224 = vsel %vm223, %v218, -inf
        %v225 = vrot.slane %v224, 4
        %v226 = vmax.f32 %v224, %v225
        %v227 = vrot.slane %v226, 2
        %v228 = vmax.f32 %v226, %v227
        %v229 = vrot.slane %v228, 1
        %v230 = vmax.f32 %v228, %v229
        %v231 = vsel %vm223, %v221, -inf
        %v232 = vrot.slane %v231, 4
        %v233 = vmax.f32 %v231, %v232
        %v234 = vrot.slane %v233, 2
        %v235 = vmax.f32 %v233, %v234
        %v236 = vrot.slane %v235, 1
        %v237 = vmax.f32 %v235, %v236
        %v238 = vsel %vm223, %v218, 0.0
        %v239 = vrot.slane %v238, 4
        %v240 = vadd.f32 %v238, %v239
        %v241 = vrot.slane %v240, 2
        %v242 = vadd.f32 %v240, %v241
        %v243 = vrot.slane %v242, 1
        %v244 = vadd.f32 %v242, %v243
        %v245 = vsel %vm223, %v221, 0.0
        %v246 = vrot.slane %v245, 4
        %v247 = vadd.f32 %v245, %v246
        %v248 = vrot.slane %v247, 2
        %v249 = vadd.f32 %v247, %v248
        %v250 = vrot.slane %v249, 1
        %v251 = vadd.f32 %v249, %v250
        %v252 = vmul.f32 %v244, 0.25
        %v253 = vmul.f32 %v251, 0.25
        %v255 = vcombine.high %v204, %v204
        %v257 = vsel %vm223, %v204, 0.0
        %v258 = vrot.slane %v257, 4
        %v259 = vadd.f32 %v257, %v258
        %v260 = vrot.slane %v259, 2
        %v261 = vadd.f32 %v259, %v260
        %v262 = vrot.slane %v261, 1
        %v263 = vadd.f32 %v261, %v262
        %v264 = vsel %vm223, %v255, 0.0
        %v265 = vrot.slane %v264, 4
        %v266 = vadd.f32 %v264, %v265
        %v267 = vrot.slane %v266, 2
        %v268 = vadd.f32 %v266, %v267
        %v269 = vrot.slane %v268, 1
        %v270 = vadd.f32 %v268, %v269
        %v271 = vmul.f32 %v263, 0.25
        %v272 = vmul.f32 %v270, 0.25
        %v273 = vsub.f32 %v271, %v252
        %v274 = vsub.f32 %v272, %v253
        %v276 = vcombine.high %v219, %v219
        %v278 = vsel %vm223, %v219, -inf
        %v279 = vrot.slane %v278, 4
        %v280 = vmax.f32 %v278, %v279
        %v281 = vrot.slane %v280, 2
        %v282 = vmax.f32 %v280, %v281
        %v283 = vrot.slane %v282, 1
        %v284 = vmax.f32 %v282, %v283
        %v285 = vsel %vm223, %v276, -inf
        %v286 = vrot.slane %v285, 4
        %v287 = vmax.f32 %v285, %v286
        %v288 = vrot.slane %v287, 2
        %v289 = vmax.f32 %v287, %v288
        %v290 = vrot.slane %v289, 1
        %v291 = vmax.f32 %v289, %v290
        %vm292 = vcmask 1040384
        %v293 = vsel %vm292, %v230, %v284
        %v294 = vsel %vm292, %v237, %v291
        %v295 = vsel %vm292, %v252, %v273
        %v296 = vsel %vm292, %v253, %v274
        %v297 = vld [vmem:[#allocation5] sm:$0xff]
        %v298 = vld [vmem:[#allocation5 + $0x8] sm:$0xff]
        %v299 = vld [vmem:[#allocation5 + $0x10] sm:$0xff]
        %v300 = vld [vmem:[#allocation5 + $0x18] sm:$0xff]
        %v301 = vld [vmem:[#allocation5 + $0x20] sm:$0xff]
        %v302 = vld [vmem:[#allocation5 + $0x28] sm:$0xff]
        %v303 = vld [vmem:[#allocation5 + $0x30] sm:$0xff]
        %v304 = vld [vmem:[#allocation5 + $0x38] sm:$0xff]
        %v305 = vld [vmem:[#allocation5 + $0x40] sm:$0xff]
        %v306 = vld [vmem:[#allocation5 + $0x48] sm:$0xff]
        %v307 = vld [vmem:[#allocation5 + $0x50] sm:$0xff]
        %v308 = vld [vmem:[#allocation5 + $0x58] sm:$0xff]
        %v309 = vld [vmem:[#allocation5 + $0x60] sm:$0xff]
        %v310 = vld [vmem:[#allocation5 + $0x68] sm:$0xff]
        %v311 = vld [vmem:[#allocation5 + $0x70] sm:$0xff]
        %v312 = vld [vmem:[#allocation5 + $0x78] sm:$0xff]
        %v313 = vld [vmem:[#allocation5 + $0x80] sm:$0xff]
        %v314 = vld [vmem:[#allocation5 + $0x88] sm:$0xff]
        %v315 = vld [vmem:[#allocation5 + $0x90] sm:$0xff]
        %v316 = vld [vmem:[#allocation5 + $0x98] sm:$0xff]
        %v317 = vld [vmem:[#allocation5 + $0xa0] sm:$0xff]
        %v318 = vld [vmem:[#allocation5 + $0xa8] sm:$0xff]
        %v319 = vld [vmem:[#allocation5 + $0xb0] sm:$0xff]
        %v320 = vld [vmem:[#allocation5 + $0xb8] sm:$0xff]
        %v321 = vld [vmem:[#allocation5 + $0xc0] sm:$0xff]
        %v322 = vld [vmem:[#allocation5 + $0xc8] sm:$0xff]
        %v323 = vld [vmem:[#allocation5 + $0xd0] sm:$0xff]
        %v324 = vld [vmem:[#allocation5 + $0xd8] sm:$0xff]
        %v325 = vld [vmem:[#allocation5 + $0xe0] sm:$0xff]
        %v326 = vld [vmem:[#allocation5 + $0xe8] sm:$0xff]
        %v327 = vld [vmem:[#allocation5 + $0xf0] sm:$0xff]
        %v328 = vld [vmem:[#allocation5 + $0xf8] sm:$0xff]
        %v329 = vld [vmem:[#allocation5 + $0x100] sm:$0xff]
        %v330 = vld [vmem:[#allocation5 + $0x108] sm:$0xff]
        %v331 = vld [vmem:[#allocation5 + $0x110] sm:$0xff]
        %v332 = vld [vmem:[#allocation5 + $0x118] sm:$0xff]
        %v333 = vld [vmem:[#allocation5 + $0x120] sm:$0xff]
        %v334 = vld [vmem:[#allocation5 + $0x128] sm:$0xff]
        %v335 = vld [vmem:[#allocation5 + $0x130] sm:$0xff]
        %v336 = vld [vmem:[#allocation5 + $0x138] sm:$0xff]
        %v337 = vld [vmem:[#allocation5 + $0x140] sm:$0xff]
        %v338 = vld [vmem:[#allocation5 + $0x148] sm:$0xff]
        %v339 = vld [vmem:[#allocation5 + $0x150] sm:$0xff]
        %v340 = vld [vmem:[#allocation5 + $0x158] sm:$0xff]
        %v341 = vld [vmem:[#allocation5 + $0x160] sm:$0xff]
        %v342 = vld [vmem:[#allocation5 + $0x168] sm:$0xff]
        %v343 = vld [vmem:[#allocation5 + $0x170] sm:$0xff]
        %v344 = vld [vmem:[#allocation5 + $0x178] sm:$0xff]
        %v345 = vld [vmem:[#allocation5 + $0x180] sm:$0xff]
        %v346 = vld [vmem:[#allocation5 + $0x188] sm:$0xff]
        %v347 = vld [vmem:[#allocation5 + $0x190] sm:$0xff]
        %v348 = vld [vmem:[#allocation5 + $0x198] sm:$0xff]
        %v349 = vld [vmem:[#allocation5 + $0x1a0] sm:$0xff]
        %v350 = vld [vmem:[#allocation5 + $0x1a8] sm:$0xff]
        %v351 = vld [vmem:[#allocation5 + $0x1b0] sm:$0xff]
        %v352 = vld [vmem:[#allocation5 + $0x1b8] sm:$0xff]
        %v353 = vld [vmem:[#allocation5 + $0x1c0] sm:$0xff]
        %v354 = vld [vmem:[#allocation5 + $0x1c8] sm:$0xff]
        %v355 = vld [vmem:[#allocation5 + $0x1d0] sm:$0xff]
        %v356 = vld [vmem:[#allocation5 + $0x1d8] sm:$0xff]
        %v357 = vld [vmem:[#allocation5 + $0x1e0] sm:$0xff]
        %v358 = vld [vmem:[#allocation5 + $0x1e8] sm:$0xff]
        %v359 = vld [vmem:[#allocation5 + $0x1f0] sm:$0xff]
        %v360 = vld [vmem:[#allocation5 + $0x1f8] sm:$0xff]
        %s361 = scalar_lea.vmem [#allocation5], 512
        %v362 = vld [vmem:[%s361] sm:$0xff]
        %v363 = vld [vmem:[%s361 + $0x8] sm:$0xff]
        %v364 = vld [vmem:[%s361 + $0x10] sm:$0xff]
        %v365 = vld [vmem:[%s361 + $0x18] sm:$0xff]
        %v366 = vld [vmem:[%s361 + $0x20] sm:$0xff]
        %v367 = vld [vmem:[%s361 + $0x28] sm:$0xff]
        %v368 = vld [vmem:[%s361 + $0x30] sm:$0xff]
        %v369 = vld [vmem:[%s361 + $0x38] sm:$0xff]
        %v370 = vld [vmem:[%s361 + $0x40] sm:$0xff]
        %v371 = vld [vmem:[%s361 + $0x48] sm:$0xff]
        %v372 = vld [vmem:[%s361 + $0x50] sm:$0xff]
        %v373 = vld [vmem:[%s361 + $0x58] sm:$0xff]
        %v374 = vld [vmem:[%s361 + $0x60] sm:$0xff]
        %v375 = vld [vmem:[%s361 + $0x68] sm:$0xff]
        %v376 = vld [vmem:[%s361 + $0x70] sm:$0xff]
        %v377 = vld [vmem:[%s361 + $0x78] sm:$0xff]
        %v378 = vld [vmem:[%s361 + $0x80] sm:$0xff]
        %v379 = vld [vmem:[%s361 + $0x88] sm:$0xff]
        %v380 = vld [vmem:[%s361 + $0x90] sm:$0xff]
        %v381 = vld [vmem:[%s361 + $0x98] sm:$0xff]
        %v382 = vld [vmem:[%s361 + $0xa0] sm:$0xff]
        %v383 = vld [vmem:[%s361 + $0xa8] sm:$0xff]
        %v384 = vld [vmem:[%s361 + $0xb0] sm:$0xff]
        %v385 = vld [vmem:[%s361 + $0xb8] sm:$0xff]
        %v386 = vld [vmem:[%s361 + $0xc0] sm:$0xff]
        %v387 = vld [vmem:[%s361 + $0xc8] sm:$0xff]
        %v388 = vld [vmem:[%s361 + $0xd0] sm:$0xff]
        %v389 = vld [vmem:[%s361 + $0xd8] sm:$0xff]
        %v390 = vld [vmem:[%s361 + $0xe0] sm:$0xff]
        %v391 = vld [vmem:[%s361 + $0xe8] sm:$0xff]
        %v392 = vld [vmem:[%s361 + $0xf0] sm:$0xff]
        %v393 = vld [vmem:[%s361 + $0xf8] sm:$0xff]
        %v394 = vld [vmem:[%s361 + $0x100] sm:$0xff]
        %v395 = vld [vmem:[%s361 + $0x108] sm:$0xff]
        %v396 = vld [vmem:[%s361 + $0x110] sm:$0xff]
        %v397 = vld [vmem:[%s361 + $0x118] sm:$0xff]
        %v398 = vld [vmem:[%s361 + $0x120] sm:$0xff]
        %v399 = vld [vmem:[%s361 + $0x128] sm:$0xff]
        %v400 = vld [vmem:[%s361 + $0x130] sm:$0xff]
        %v401 = vld [vmem:[%s361 + $0x138] sm:$0xff]
        %v402 = vld [vmem:[%s361 + $0x140] sm:$0xff]
        %v403 = vld [vmem:[%s361 + $0x148] sm:$0xff]
        %v404 = vld [vmem:[%s361 + $0x150] sm:$0xff]
        %v405 = vld [vmem:[%s361 + $0x158] sm:$0xff]
        %v406 = vld [vmem:[%s361 + $0x160] sm:$0xff]
        %v407 = vld [vmem:[%s361 + $0x168] sm:$0xff]
        %v408 = vld [vmem:[%s361 + $0x170] sm:$0xff]
        %v409 = vld [vmem:[%s361 + $0x178] sm:$0xff]
        %v410 = vld [vmem:[%s361 + $0x180] sm:$0xff]
        %v411 = vld [vmem:[%s361 + $0x188] sm:$0xff]
        %v412 = vld [vmem:[%s361 + $0x190] sm:$0xff]
        %v413 = vld [vmem:[%s361 + $0x198] sm:$0xff]
        %v414 = vld [vmem:[%s361 + $0x1a0] sm:$0xff]
        %v415 = vld [vmem:[%s361 + $0x1a8] sm:$0xff]
        %v416 = vld [vmem:[%s361 + $0x1b0] sm:$0xff]
        %v417 = vld [vmem:[%s361 + $0x1b8] sm:$0xff]
        %v418 = vld [vmem:[%s361 + $0x1c0] sm:$0xff]
        %v419 = vld [vmem:[%s361 + $0x1c8] sm:$0xff]
        %v420 = vld [vmem:[%s361 + $0x1d0] sm:$0xff]
        %v421 = vld [vmem:[%s361 + $0x1d8] sm:$0xff]
        %v422 = vld [vmem:[%s361 + $0x1e0] sm:$0xff]
        %v423 = vld [vmem:[%s361 + $0x1e8] sm:$0xff]
        %v424 = vld [vmem:[%s361 + $0x1f0] sm:$0xff]
        %v425 = vld [vmem:[%s361 + $0x1f8] sm:$0xff]
        %426 = vmatprep.subr.mxu0 %v363
        %427 = vmatpush1.msra.mxu0 %v362
        %428 = vmatprep.subr.mxu0 %v365
        %429 = vmatpush1.msra.mxu0 %v364
        %430 = vmatprep.subr.mxu0 %v367
        %431 = vmatpush1.msra.mxu0 %v366
        %432 = vmatprep.subr.mxu0 %v369
        %433 = vmatpush1.msra.mxu0 %v368
        %434 = vmatprep.subr.mxu0 %v371
        %435 = vmatpush1.msra.mxu0 %v370
        %436 = vmatprep.subr.mxu0 %v373
        %437 = vmatpush1.msra.mxu0 %v372
        %438 = vmatprep.subr.mxu0 %v375
        %439 = vmatpush1.msra.mxu0 %v374
        %440 = vmatprep.subr.mxu0 %v377
        %441 = vmatpush1.msra.mxu0 %v376
        %442 = vmatprep.subr.mxu0 %v379
        %443 = vmatpush1.msra.mxu0 %v378
        %444 = vmatprep.subr.mxu0 %v381
        %445 = vmatpush1.msra.mxu0 %v380
        %446 = vmatprep.subr.mxu0 %v383
        %447 = vmatpush1.msra.mxu0 %v382
        %448 = vmatprep.subr.mxu0 %v385
        %449 = vmatpush1.msra.mxu0 %v384
        %450 = vmatprep.subr.mxu0 %v387
        %451 = vmatpush1.msra.mxu0 %v386
        %452 = vmatprep.subr.mxu0 %v389
        %453 = vmatpush1.msra.mxu0 %v388
        %454 = vmatprep.subr.mxu0 %v391
        %455 = vmatpush1.msra.mxu0 %v390
        %456 = vmatprep.subr.mxu0 %v393
        %457 = vmatpush1.msra.mxu0 %v392
        %458 = vmatprep.subr.mxu0 %v395
        %459 = vmatpush1.msra.mxu0 %v394
        %460 = vmatprep.subr.mxu0 %v397
        %461 = vmatpush1.msra.mxu0 %v396
        %462 = vmatprep.subr.mxu0 %v399
        %463 = vmatpush1.msra.mxu0 %v398
        %464 = vmatprep.subr.mxu0 %v401
        %465 = vmatpush1.msra.mxu0 %v400
        %466 = vmatprep.subr.mxu0 %v403
        %467 = vmatpush1.msra.mxu0 %v402
        %468 = vmatprep.subr.mxu0 %v405
        %469 = vmatpush1.msra.mxu0 %v404
        %470 = vmatprep.subr.mxu0 %v407
        %471 = vmatpush1.msra.mxu0 %v406
        %472 = vmatprep.subr.mxu0 %v409
        %473 = vmatpush1.msra.mxu0 %v408
        %474 = vmatprep.subr.mxu0 %v411
        %475 = vmatpush1.msra.mxu0 %v410
        %476 = vmatprep.subr.mxu0 %v413
        %477 = vmatpush1.msra.mxu0 %v412
        %478 = vmatprep.subr.mxu0 %v415
        %479 = vmatpush1.msra.mxu0 %v414
        %480 = vmatprep.subr.mxu0 %v417
        %481 = vmatpush1.msra.mxu0 %v416
        %482 = vmatprep.subr.mxu0 %v419
        %483 = vmatpush1.msra.mxu0 %v418
        %484 = vmatprep.subr.mxu0 %v421
        %485 = vmatpush1.msra.mxu0 %v420
        %486 = vmatprep.subr.mxu0 %v423
        %487 = vmatpush1.msra.mxu0 %v422
        %488 = vmatprep.subr.mxu0 %v425
        %489 = vmatpush1.msra.mxu0 %v424
        %490 = vmatprep.mubr.f32.mxu0 %v296
        %491 = vmatmul.mubr.f32.gmra.mrb[0].mxu0 %v295
        %v492 = vpop.f32.mrb[0].mxu0
        %v493 = vadd.f32 0.0, %v492
        %v494 = vpop.f32.mrb[0].mxu0
        %v495 = vadd.f32 0.0, %v494
        %496 = vdwg.mxu0
        %497 = vmatprep.subr.mxu0 %v298
        %498 = vmatpush1.msra.mxu0 %v297
        %499 = vmatprep.subr.mxu0 %v300
        %500 = vmatpush1.msra.mxu0 %v299
        %501 = vmatprep.subr.mxu0 %v302
        %502 = vmatpush1.msra.mxu0 %v301
        %503 = vmatprep.subr.mxu0 %v304
        %504 = vmatpush1.msra.mxu0 %v303
        %505 = vmatprep.subr.mxu0 %v306
        %506 = vmatpush1.msra.mxu0 %v305
        %507 = vmatprep.subr.mxu0 %v308
        %508 = vmatpush1.msra.mxu0 %v307
        %509 = vmatprep.subr.mxu0 %v310
        %510 = vmatpush1.msra.mxu0 %v309
        %511 = vmatprep.subr.mxu0 %v312
        %512 = vmatpush1.msra.mxu0 %v311
        %513 = vmatprep.subr.mxu0 %v314
        %514 = vmatpush1.msra.mxu0 %v313
        %515 = vmatprep.subr.mxu0 %v316
        %516 = vmatpush1.msra.mxu0 %v315
        %517 = vmatprep.subr.mxu0 %v318
        %518 = vmatpush1.msra.mxu0 %v317
        %519 = vmatprep.subr.mxu0 %v320
        %520 = vmatpush1.msra.mxu0 %v319
        %521 = vmatprep.subr.mxu0 %v322
        %522 = vmatpush1.msra.mxu0 %v321
        %523 = vmatprep.subr.mxu0 %v324
        %524 = vmatpush1.msra.mxu0 %v323
        %525 = vmatprep.subr.mxu0 %v326
        %526 = vmatpush1.msra.mxu0 %v325
        %527 = vmatprep.subr.mxu0 %v328
        %528 = vmatpush1.msra.mxu0 %v327
        %529 = vmatprep.subr.mxu0 %v330
        %530 = vmatpush1.msra.mxu0 %v329
        %531 = vmatprep.subr.mxu0 %v332
        %532 = vmatpush1.msra.mxu0 %v331
        %533 = vmatprep.subr.mxu0 %v334
        %534 = vmatpush1.msra.mxu0 %v333
        %535 = vmatprep.subr.mxu0 %v336
        %536 = vmatpush1.msra.mxu0 %v335
        %537 = vmatprep.subr.mxu0 %v338
        %538 = vmatpush1.msra.mxu0 %v337
        %539 = vmatprep.subr.mxu0 %v340
        %540 = vmatpush1.msra.mxu0 %v339
        %541 = vmatprep.subr.mxu0 %v342
        %542 = vmatpush1.msra.mxu0 %v341
        %543 = vmatprep.subr.mxu0 %v344
        %544 = vmatpush1.msra.mxu0 %v343
        %545 = vmatprep.subr.mxu0 %v346
        %546 = vmatpush1.msra.mxu0 %v345
        %547 = vmatprep.subr.mxu0 %v348
        %548 = vmatpush1.msra.mxu0 %v347
        %549 = vmatprep.subr.mxu0 %v350
        %550 = vmatpush1.msra.mxu0 %v349
        %551 = vmatprep.subr.mxu0 %v352
        %552 = vmatpush1.msra.mxu0 %v351
        %553 = vmatprep.subr.mxu0 %v354
        %554 = vmatpush1.msra.mxu0 %v353
        %555 = vmatprep.subr.mxu0 %v356
        %556 = vmatpush1.msra.mxu0 %v355
        %557 = vmatprep.subr.mxu0 %v358
        %558 = vmatpush1.msra.mxu0 %v357
        %559 = vmatprep.subr.mxu0 %v360
        %560 = vmatpush1.msra.mxu0 %v359
        %561 = vmatprep.mubr.f32.mxu0 %v294
        %562 = vmatmul.mubr.f32.gmra.mrb[0].mxu0 %v293
        %v563 = vpop.f32.mrb[0].mxu0
        %v564 = vadd.f32 %v493, %v563
        %v565 = vpop.f32.mrb[0].mxu0
        %v566 = vadd.f32 %v495, %v565
        %567 = vdwg.mxu0
        %v568 = vxor.u32 %v564, 2147483648
        %v569 = vxor.u32 %v566, 2147483648
        %v570 = vmul.f32 %v568, 1.442695
        %v571 = vpow.pop %v570
        %v572 = vmul.f32 %v569, 1.442695
        %v573 = vpow.pop %v572
        %v574 = vadd.f32 %v571, 1.0
        %v575 = vadd.f32 %v573, 1.0
        %v576 = vrcp.pop %v574
        %v577 = vmul.f32 1.0, %v576
        %v578 = vrcp.pop %v575
        %v579 = vmul.f32 1.0, %v578
        %v580 = vlaneseq
        %v581 = vshrl.u32 %v580, 7
        %v582 = vsub.s32 0, %v581
        %v583 = vrot.slane %v577, %v582
        %v584 = vlaneseq
        %v585 = vshrl.u32 %v584, 7
        %v586 = vsub.s32 0, %v585
        %v587 = vrot.slane %v579, %v586
        %v588 = vmul.f32 %v208, %v583
        %v589 = vmul.f32 %v208, %v587
        %591 = vset.pattern.permute.xlu0 0
        %592 = vperm.xlu0 %591, %v203
        %v593 = vpop.permute.xlu0 %592
        %v595 = vlaneseq
        %v596 = vshrl.u32 %v595, 7
        %v597 = vsub.s32 1, %v596
        %v598 = vrot.slane %v577, %v597
        %v599 = vlaneseq
        %v600 = vshrl.u32 %v599, 7
        %v601 = vsub.s32 1, %v600
        %v602 = vrot.slane %v579, %v601
        %v603 = vmul.f32 %v593, %v598
        %v604 = vmul.f32 %v593, %v602
        %v605 = vadd.f32 %v588, %v603
        %v606 = vadd.f32 %v589, %v604
        %v609 = vcombine.low %v605, %v606
        %v611 = vmul.f32 %v204, %v609
        %612 = vst [vmem:[%s201] sm:$0xff] %v611
        %s613 = sand.u32 %s97, 1
        %s614 = scalar_lea.sflag [#allocation4], %s613
        %s615 = sand.u32 %s97, 1
        %s616 = smul.addr %s615, 8
        %s617 = scalar_lea.vmem [#allocation7], %s616
        // Predicated region
        $region41: #{tpu_custom_call.1} parent=31 // pred_check
          %p618 = pneg %p107
        $region42: #{tpu_custom_call.1} parent=31 // pred_check_branch
          %620 = sbr.rel (%p618) target = $region44
        $region43: #{tpu_custom_call.1} parent=31 // pred_region
          %s622 = ssub.s32 128, 128
          %623 = vsyncadd %s614, %s622
          %s624 = smul.addr %s21, 2
          %s625 = smul.addr %s624, 64
          %s626 = scalar_lea.hbm %s3, %s625
          %s628 = sshll.u32 %s617, 4
          %s629 = int_to_ptr.vmem [resolvable:$true] %s628
          %631 = dma.vmem_to_hbm [thread:$0]  %s629, 128, %s626, %s614
        $region44: #{tpu_custom_call.1} parent=31 // pred_fallthru
          _
      $region32: #{tpu_custom_call.1} parent=5 // pred_fallthru
        _
      %p632 = scmp.le.s32.totalorder 2, %s16
      // Predicated region
      $region45: #{tpu_custom_call.1} parent=5 // pred_check
        %p633 = pneg %p632
      $region46: #{tpu_custom_call.1} parent=5 // pred_check_branch
        %635 = sbr.rel (%p633) target = $region48
      $region47: #{tpu_custom_call.1} parent=5 // pred_region
        %s636 = ssub.s32 %s16, 2
        // Predicated region
        $region49: #{tpu_custom_call.1} parent=47 // pred_check
          %p637 = pneg %p113
        $region50: #{tpu_custom_call.1} parent=47 // pred_check_branch
          %639 = sbr.rel (%p637) target = $region52
        $region51: #{tpu_custom_call.1} parent=47 // pred_region
          %s640 = sand.u32 %s98, 1
          %s641 = scalar_lea.sflag [#allocation4], %s640
          %s642 = sand.u32 %s98, 1
          %s643 = smul.addr %s642, 8
          %s644 = scalar_lea.vmem [#allocation7], %s643
          %645 = dma.done %s641, 128
        $region52: #{tpu_custom_call.1} parent=47 // pred_fallthru
          _
      $region48: #{tpu_custom_call.1} parent=5 // pred_fallthru
        _
    $region6: #{tpu_custom_call.1} parent=1 // loop_footer
      %s20 = sadd.s32 1, %s16
    $region7: #{tpu_custom_call.1} parent=1 // loop_footer_branch
      %15 = sbr.rel target = $region3
    $region8: #{tpu_custom_call.1} parent=1 // loop_exit
      _
    %646 = vsyncpa [#allocation3], 1
    %s647 = scalar_lea.sflag [#allocation3], 1
    %648 = vsyncpa %s647, 1
    %649 = vsyncpa [#allocation6], 1
    %650 = vsyncpa [#allocation4], 1
    %s651 = scalar_lea.sflag [#allocation4], 1
    %652 = vsyncpa %s651, 1

</llo_original>
